<compile_context>
chip_gen: v7x
topology: tpu7x:2x2x1
jax: 0.10.0
libtpu: 0.0.40
codegen_flags: <defaults>
</compile_context>

<pallas_src>
import functools

import jax
import jax.numpy as jnp
import numpy as np
from jax.experimental import pallas as pl
from jax.experimental.pallas import tpu as pltpu

EPS = 1e-5
LANE = 128
SUB = 8
_VREG = SUB * LANE        # 1024 voxels per (8,128) vreg tile
_TSB_TARGET = 32          # (8,128) tiles per grid step -> up to 32768 voxels/step


# ----------------------------------------------------------------------------
# Kernel 1: per-class segmentation statistics (softmax over channels + dice
# partial sums), accumulated over a (batch, voxel-tile) grid into a lane-dense
# (3, C, 8, 128) resident output.
# ----------------------------------------------------------------------------
def _seg_stats_kernel(logits_ref, labels_ref, stats_ref, *, apply_mask):
    @pl.when(jnp.logical_and(pl.program_id(0) == 0, pl.program_id(1) == 0))
    def _init():
        stats_ref[...] = jnp.zeros_like(stats_ref)

    x = logits_ref[...].astype(jnp.float32)        # (C, TSB, 8, 128)
    labels = labels_ref[...]                       # (TSB, 8, 128) int32

    # Softmax over channels: axis 0 is a leading (non-tiled) axis, so max/sum
    # are plain vreg-to-vreg VPU ops, no cross-lane XLU reductions.
    m = jnp.max(x, axis=0, keepdims=True)
    e = jnp.exp(x - m)
    inv_den = 1.0 / jnp.sum(e, axis=0, keepdims=True)
    probs = e * inv_den                            # (C, TSB, 8, 128)

    # One-hot built in-kernel from int labels (no (C, N) one-hot in HBM).
    ch = jax.lax.broadcasted_iota(jnp.int32, x.shape, 0)
    onehot = (ch == labels[None]).astype(jnp.float32)

    if apply_mask:
        # Padded voxels carry label == -1: onehot is already 0 there; also
        # zero their probability mass so psum only counts real voxels.
        probs = probs * (labels >= 0).astype(jnp.float32)[None]

    # Reduce only over the vreg axis (axis 1): pure VPU adds into the
    # lane-dense accumulators; the final cross-lane reduce happens once in the
    # combine kernel.
    stats_ref[0] += jnp.sum(probs * onehot, axis=1)   # intersection  (C, 8, 128)
    stats_ref[1] += jnp.sum(probs, axis=1)            # prediction mass
    stats_ref[2] += jnp.sum(onehot, axis=1)           # target mass


# ----------------------------------------------------------------------------
# Kernel 2: finalize dice/mIoU, compute the IDH cross-entropy (fused), apply
# task weights, and do the AutomaticWeightedLoss3 combination arithmetic.
# ----------------------------------------------------------------------------
def _combine_kernel(stats_ref, idh_logits_ref, idh_labels_ref, w_ref,
                    loss_ref, seg_ref, idh_ref, dice_ref, miou_ref,
                    std1_ref, std2_ref):
    num_classes = stats_ref.shape[1]

    def _reduce_minor(x):                       # (C, 8, 128) -> (C, 1, 1)
        return jnp.sum(jnp.sum(x, axis=2, keepdims=True), axis=1, keepdims=True)

    inter = _reduce_minor(stats_ref[0])
    psum = _reduce_minor(stats_ref[1])
    tsum = _reduce_minor(stats_ref[2])
    union = psum + tsum
    dice_c = (2.0 * inter + EPS) / (union + EPS)              # per-class dice
    iou_c = (inter + EPS) / (union - inter + EPS)             # per-class IoU
    dice = jnp.sum(dice_c, axis=0, keepdims=True)[0] / num_classes   # (1, 1)
    miou = jnp.sum(iou_c, axis=0, keepdims=True)[0] / num_classes    # (1, 1)

    # IDH head: mean cross-entropy over the batch.
    logits = idh_logits_ref[...].astype(jnp.float32)          # (B, K)
    lab = idh_labels_ref[...]                                 # (B, 1) int32
    b, k = logits.shape
    mx = jnp.max(logits, axis=1, keepdims=True)
    lse = jnp.log(jnp.sum(jnp.exp(logits - mx), axis=1, keepdims=True)) + mx
    onehot = (jax.lax.broadcasted_iota(jnp.int32, (b, k), 1) == lab
              ).astype(jnp.float32)
    picked = jnp.sum(onehot * logits, axis=1, keepdims=True)  # (B, 1)
    ce = jnp.sum(lse - picked, axis=0, keepdims=True) / b     # (1, 1)

    w0 = w_ref[0]                                             # SMEM scalars
    w1 = w_ref[1]
    seg_loss = (1.0 - dice) * w0
    idh_loss = ce * w1
    inv_denom = 1.0 / (idh_loss + seg_loss)
    loss_ref[...] = (idh_loss * idh_loss + seg_loss * seg_loss) * inv_denom
    seg_ref[...] = seg_loss
    idh_ref[...] = idh_loss
    dice_ref[...] = dice
    miou_ref[...] = miou
    std1_ref[...] = seg_loss * inv_denom
    std2_ref[...] = idh_loss * inv_denom


# ----------------------------------------------------------------------------
# Wrapper
# ----------------------------------------------------------------------------
def automatic_weighted_loss3(seg_logits, seg_labels, idh_logits, idh_labels,
                             weights):
    """Forward pass of AutomaticWeightedLoss3 with concrete loss_fns.

    seg_logits: (B, C, H, W) float logits (NCHW)
    seg_labels: (B, H, W) int class labels
    idh_logits: (B, K) float logits
    idh_labels: (B,) int class labels
    weights:    (2,) float per-task weights
    Returns (loss, seg_loss, idh_loss, dice, miou, std_1, std_2) scalars.
    """
    B, C, H, W = seg_logits.shape
    HW = H * W

    # Lay out voxels as (8,128) vreg tiles without any HBM transpose: the
    # reshape of the trailing contiguous H*W axis is metadata-only.
    n_blk = -(-HW // _VREG)                      # (8,128) tiles per batch item
    tsb = min(n_blk, _TSB_TARGET)                # tiles per grid step
    n_blk_pad = -(-n_blk // tsb) * tsb
    hw_pad = n_blk_pad * _VREG

    logits_f = seg_logits.reshape(B, C, HW)
    labels_f = seg_labels.reshape(B, HW).astype(jnp.int32)
    needs_pad = hw_pad != HW
    if needs_pad:
        pad = hw_pad - HW
        logits_f = jnp.pad(logits_f, ((0, 0), (0, 0), (0, pad)))
        labels_f = jnp.pad(labels_f, ((0, 0), (0, pad)), constant_values=-1)
    logits_r = logits_f.reshape(B, C, n_blk_pad, SUB, LANE)
    labels_r = labels_f.reshape(B, n_blk_pad, SUB, LANE)
    n_tiles = n_blk_pad // tsb

    stats = pl.pallas_call(
        functools.partial(_seg_stats_kernel, apply_mask=needs_pad),
        out_shape=jax.ShapeDtypeStruct((3, C, SUB, LANE), jnp.float32),
        grid=(B, n_tiles),
        in_specs=[
            pl.BlockSpec((None, C, tsb, SUB, LANE),
                         lambda b, j: (b, 0, j, 0, 0)),
            pl.BlockSpec((None, tsb, SUB, LANE),
                         lambda b, j: (b, j, 0, 0)),
        ],
        out_specs=pl.BlockSpec((3, C, SUB, LANE), lambda b, j: (0, 0, 0, 0)),
        compiler_params=pltpu.CompilerParams(
            dimension_semantics=("arbitrary", "arbitrary")),
    )(logits_r, labels_r)

    Bc, K = idh_logits.shape
    w = jnp.asarray(weights, dtype=jnp.float32).reshape(2)
    outs = pl.pallas_call(
        _combine_kernel,
        out_shape=[jax.ShapeDtypeStruct((1, 1), jnp.float32)] * 7,
        grid=(1,),
        in_specs=[
            pl.BlockSpec((3, C, SUB, LANE), lambda i: (0, 0, 0, 0)),
            pl.BlockSpec((Bc, K), lambda i: (0, 0)),
            pl.BlockSpec((Bc, 1), lambda i: (0, 0)),
            pl.BlockSpec(memory_space=pltpu.MemorySpace.SMEM),
        ],
        out_specs=[pl.BlockSpec((1, 1), lambda i: (0, 0))] * 7,
    )(stats, idh_logits.astype(jnp.float32),
      idh_labels.reshape(Bc, 1).astype(jnp.int32), w)

    loss, seg_loss, idh_loss, dice, miou, std1, std2 = [o[0, 0] for o in outs]
    return loss, seg_loss, idh_loss, dice, miou, std1, std2


# ----------------------------------------------------------------------------
# Pure-JAX reference (same math) for a correctness check.
# ----------------------------------------------------------------------------
def _reference(seg_logits, seg_labels, idh_logits, idh_labels, weights):
    B, C, H, W = seg_logits.shape
    probs = jax.nn.softmax(seg_logits.astype(jnp.float32), axis=1)
    onehot = jnp.transpose(
        jax.nn.one_hot(seg_labels, C, dtype=jnp.float32), (0, 3, 1, 2))
    inter = jnp.sum(probs * onehot, axis=(0, 2, 3))
    union = jnp.sum(probs, axis=(0, 2, 3)) + jnp.sum(onehot, axis=(0, 2, 3))
    dice_c = (2.0 * inter + EPS) / (union + EPS)
    iou_c = (inter + EPS) / (union - inter + EPS)
    dice = jnp.mean(dice_c)
    miou = jnp.mean(iou_c)
    seg_loss = (1.0 - dice) * weights[0]
    logp = jax.nn.log_softmax(idh_logits.astype(jnp.float32), axis=1)
    ce = -jnp.mean(jnp.take_along_axis(logp, idh_labels[:, None], axis=1))
    idh_loss = ce * weights[1]
    denom = idh_loss + seg_loss
    loss = idh_loss ** 2 / denom + seg_loss ** 2 / denom
    return loss, seg_loss, idh_loss, dice, miou, seg_loss / denom, idh_loss / denom


if __name__ == "__main__":
    key = jax.random.PRNGKey(0)
    k1, k2, k3, k4 = jax.random.split(key, 4)
    B, C, H, W, K = 2, 4, 16, 16, 2

    seg_logits = jax.random.normal(k1, (B, C, H, W), dtype=jnp.float32)   # outputs[0]
    seg_labels = jax.random.randint(k2, (B, H, W), 0, C)                  # targets[0]
    idh_logits = jax.random.normal(k3, (B, K), dtype=jnp.float32)         # outputs[1]
    idh_labels = jax.random.randint(k4, (B,), 0, K)                       # targets[1]
    weights = jnp.array([1.0, 0.5], dtype=jnp.float32)                    # weights

    outs = automatic_weighted_loss3(seg_logits, seg_labels, idh_logits,
                                    idh_labels, weights)
    outs = jax.block_until_ready(outs)

    refs = _reference(seg_logits, seg_labels, idh_logits, idh_labels, weights)
    for got, ref in zip(outs, refs):
        assert np.allclose(np.asarray(got), np.asarray(ref),
                           rtol=1e-4, atol=1e-5), (got, ref)

    print("KERNEL_OK")
</pallas_src>

<mosaic_0001>
module attributes {stable_mosaic.version = 11 : i64} {
  func.func @_seg_stats_kernel(%arg0: i32, %arg1: i32, %arg2: memref<1x4x1x8x128xf32, #tpu.memory_space<vmem>>, %arg3: memref<1x1x8x128xi32, #tpu.memory_space<vmem>>, %arg4: memref<3x4x8x128xf32, #tpu.memory_space<vmem>>) attributes {dimension_semantics = [#tpu.dimension_semantics<arbitrary>, #tpu.dimension_semantics<arbitrary>], iteration_bounds = array<i64: 2, 1>, scalar_prefetch = 0 : i64, scratch_operands = 0 : i64, tpu.core_type = #tpu.core_type<tc>, window_params = [{transform_indices = @transform_0, window_bounds = array<i64: 1, 4, 1, 8, 128>}, {transform_indices = @transform_1, window_bounds = array<i64: 1, 1, 8, 128>}, {pipeline_mode = #tpu.pipeline_mode<synchronous>, transform_indices = @transform_2, window_bounds = array<i64: 3, 4, 8, 128>}]} {
    %c0_i32 = arith.constant 0 : i32
    %0 = arith.cmpi eq, %arg0, %c0_i32 : i32
    %c0_i32_0 = arith.constant 0 : i32
    %1 = arith.cmpi eq, %arg1, %c0_i32_0 : i32
    %2 = arith.andi %0, %1 : i1
    %3 = arith.extui %2 : i1 to i32
    %c0_i32_1 = arith.constant 0 : i32
    %4 = arith.cmpi ne, %3, %c0_i32_1 : i32
    scf.if %4 {
      %cst_38 = arith.constant 0.000000e+00 : f32
      %55 = vector.broadcast %cst_38 : f32 to vector<3x4x8x128xf32>
      %c0_39 = arith.constant 0 : index
      %c0_40 = arith.constant 0 : index
      %c0_41 = arith.constant 0 : index
      %c0_42 = arith.constant 0 : index
      %56 = vector.load %arg4[%c0_39, %c0_40, %c0_41, %c0_42] : memref<3x4x8x128xf32, #tpu.memory_space<vmem>>, vector<3x4x8x128xf32>
      tpu.vector_store %arg4[%c0_39, %c0_40, %c0_41, %c0_42], %55 {strides = array<i32>} : memref<3x4x8x128xf32, #tpu.memory_space<vmem>>, vector<3x4x8x128xf32>,
    } else {
    }
    %c0 = arith.constant 0 : index
    %c0_2 = arith.constant 0 : index
    %c0_3 = arith.constant 0 : index
    %c0_4 = arith.constant 0 : index
    %c0_5 = arith.constant 0 : index
    %5 = vector.load %arg2[%c0, %c0_2, %c0_3, %c0_4, %c0_5] : memref<1x4x1x8x128xf32, #tpu.memory_space<vmem>>, vector<1x4x1x8x128xf32>
    %6 = vector.shape_cast %5 : vector<1x4x1x8x128xf32> to vector<4x1x8x128xf32>
    %c0_6 = arith.constant 0 : index
    %c0_7 = arith.constant 0 : index
    %c0_8 = arith.constant 0 : index
    %c0_9 = arith.constant 0 : index
    %7 = vector.load %arg3[%c0_6, %c0_7, %c0_8, %c0_9] : memref<1x1x8x128xi32, #tpu.memory_space<vmem>>, vector<1x1x8x128xi32>
    %8 = vector.shape_cast %7 : vector<1x1x8x128xi32> to vector<1x8x128xi32>
    %cst = arith.constant dense<0xFF800000> : vector<1x8x128xf32>
    %9 = vector.multi_reduction <maximumf>, %6, %cst [0] : vector<4x1x8x128xf32> to vector<1x8x128xf32>
    %10 = vector.shape_cast %9 : vector<1x8x128xf32> to vector<1x1x8x128xf32>
    %11 = vector.broadcast %10 : vector<1x1x8x128xf32> to vector<4x1x8x128xf32>
    %12 = arith.subf %6, %11 : vector<4x1x8x128xf32>
    %13 = math.exp %12 : vector<4x1x8x128xf32>
    %cst_10 = arith.constant dense<0.000000e+00> : vector<1x8x128xf32>
    %14 = vector.multi_reduction <add>, %13, %cst_10 [0] : vector<4x1x8x128xf32> to vector<1x8x128xf32>
    %15 = vector.shape_cast %14 : vector<1x8x128xf32> to vector<1x1x8x128xf32>
    %cst_11 = arith.constant 1.000000e+00 : f32
    %16 = vector.broadcast %cst_11 : f32 to vector<1x1x8x128xf32>
    %17 = arith.divf %16, %15 : vector<1x1x8x128xf32>
    %18 = vector.broadcast %17 : vector<1x1x8x128xf32> to vector<4x1x8x128xf32>
    %19 = arith.mulf %13, %18 : vector<4x1x8x128xf32>
    %20 = tpu.iota {dimensions = array<i32: 0>} : vector<4x1x8x128xi32>
    %21 = vector.shape_cast %8 : vector<1x8x128xi32> to vector<1x1x8x128xi32>
    %22 = vector.broadcast %21 : vector<1x1x8x128xi32> to vector<4x1x8x128xi32>
    %23 = arith.cmpi eq, %20, %22 : vector<4x1x8x128xi32>
    %24 = arith.extui %23 : vector<4x1x8x128xi1> to vector<4x1x8x128xi32>
    %25 = arith.sitofp %24 : vector<4x1x8x128xi32> to vector<4x1x8x128xf32>
    %c0_i32_12 = arith.constant 0 : i32
    %26 = vector.broadcast %c0_i32_12 : i32 to vector<1x8x128xi32>
    %27 = arith.cmpi sge, %8, %26 : vector<1x8x128xi32>
    %28 = arith.extui %27 : vector<1x8x128xi1> to vector<1x8x128xi32>
    %29 = arith.sitofp %28 : vector<1x8x128xi32> to vector<1x8x128xf32>
    %30 = vector.shape_cast %29 : vector<1x8x128xf32> to vector<1x1x8x128xf32>
    %31 = vector.broadcast %30 : vector<1x1x8x128xf32> to vector<4x1x8x128xf32>
    %32 = arith.mulf %19, %31 : vector<4x1x8x128xf32>
    %c0_13 = arith.constant 0 : index
    %c0_14 = arith.constant 0 : index
    %c0_15 = arith.constant 0 : index
    %c0_16 = arith.constant 0 : index
    %33 = vector.load %arg4[%c0_13, %c0_14, %c0_15, %c0_16] : memref<3x4x8x128xf32, #tpu.memory_space<vmem>>, vector<1x4x8x128xf32>
    %34 = vector.shape_cast %33 : vector<1x4x8x128xf32> to vector<4x8x128xf32>
    %35 = arith.mulf %32, %25 : vector<4x1x8x128xf32>
    %cst_17 = arith.constant dense<0.000000e+00> : vector<4x8x128xf32>
    %36 = vector.multi_reduction <add>, %35, %cst_17 [1] : vector<4x1x8x128xf32> to vector<4x8x128xf32>
    %37 = arith.addf %34, %36 : vector<4x8x128xf32>
    %c0_18 = arith.constant 0 : index
    %c0_19 = arith.constant 0 : index
    %c0_20 = arith.constant 0 : index
    %c0_21 = arith.constant 0 : index
    %38 = vector.load %arg4[%c0_18, %c0_19, %c0_20, %c0_21] : memref<3x4x8x128xf32, #tpu.memory_space<vmem>>, vector<1x4x8x128xf32>
    %39 = vector.shape_cast %38 : vector<1x4x8x128xf32> to vector<4x8x128xf32>
    %40 = vector.shape_cast %37 : vector<4x8x128xf32> to vector<1x4x8x128xf32>
    tpu.vector_store %arg4[%c0_18, %c0_19, %c0_20, %c0_21], %40 {strides = array<i32>} : memref<3x4x8x128xf32, #tpu.memory_space<vmem>>, vector<1x4x8x128xf32>,
    %c1 = arith.constant 1 : index
    %c0_22 = arith.constant 0 : index
    %c0_23 = arith.constant 0 : index
    %c0_24 = arith.constant 0 : index
    %41 = vector.load %arg4[%c1, %c0_22, %c0_23, %c0_24] : memref<3x4x8x128xf32, #tpu.memory_space<vmem>>, vector<1x4x8x128xf32>
    %42 = vector.shape_cast %41 : vector<1x4x8x128xf32> to vector<4x8x128xf32>
    %cst_25 = arith.constant dense<0.000000e+00> : vector<4x8x128xf32>
    %43 = vector.multi_reduction <add>, %32, %cst_25 [1] : vector<4x1x8x128xf32> to vector<4x8x128xf32>
    %44 = arith.addf %42, %43 : vector<4x8x128xf32>
    %c1_26 = arith.constant 1 : index
    %c0_27 = arith.constant 0 : index
    %c0_28 = arith.constant 0 : index
    %c0_29 = arith.constant 0 : index
    %45 = vector.load %arg4[%c1_26, %c0_27, %c0_28, %c0_29] : memref<3x4x8x128xf32, #tpu.memory_space<vmem>>, vector<1x4x8x128xf32>
    %46 = vector.shape_cast %45 : vector<1x4x8x128xf32> to vector<4x8x128xf32>
    %47 = vector.shape_cast %44 : vector<4x8x128xf32> to vector<1x4x8x128xf32>
    tpu.vector_store %arg4[%c1_26, %c0_27, %c0_28, %c0_29], %47 {strides = array<i32>} : memref<3x4x8x128xf32, #tpu.memory_space<vmem>>, vector<1x4x8x128xf32>,
    %c2 = arith.constant 2 : index
    %c0_30 = arith.constant 0 : index
    %c0_31 = arith.constant 0 : index
    %c0_32 = arith.constant 0 : index
    %48 = vector.load %arg4[%c2, %c0_30, %c0_31, %c0_32] : memref<3x4x8x128xf32, #tpu.memory_space<vmem>>, vector<1x4x8x128xf32>
    %49 = vector.shape_cast %48 : vector<1x4x8x128xf32> to vector<4x8x128xf32>
    %cst_33 = arith.constant dense<0.000000e+00> : vector<4x8x128xf32>
    %50 = vector.multi_reduction <add>, %25, %cst_33 [1] : vector<4x1x8x128xf32> to vector<4x8x128xf32>
    %51 = arith.addf %49, %50 : vector<4x8x128xf32>
    %c2_34 = arith.constant 2 : index
    %c0_35 = arith.constant 0 : index
    %c0_36 = arith.constant 0 : index
    %c0_37 = arith.constant 0 : index
    %52 = vector.load %arg4[%c2_34, %c0_35, %c0_36, %c0_37] : memref<3x4x8x128xf32, #tpu.memory_space<vmem>>, vector<1x4x8x128xf32>
    %53 = vector.shape_cast %52 : vector<1x4x8x128xf32> to vector<4x8x128xf32>
    %54 = vector.shape_cast %51 : vector<4x8x128xf32> to vector<1x4x8x128xf32>
    tpu.vector_store %arg4[%c2_34, %c0_35, %c0_36, %c0_37], %54 {strides = array<i32>} : memref<3x4x8x128xf32, #tpu.memory_space<vmem>>, vector<1x4x8x128xf32>,
    return
  }
  func.func @transform_0(%arg0: i32, %arg1: i32) -> (i32, i32, i32, i32, i32) {
    %c0_i32 = arith.constant 0 : i32
    %c0_i32_0 = arith.constant 0 : i32
    %c0_i32_1 = arith.constant 0 : i32
    %c0_i32_2 = arith.constant 0 : i32
    return %arg0, %c0_i32, %arg1, %c0_i32_0, %c0_i32_1 : i32, i32, i32, i32, i32
  }
  func.func @transform_1(%arg0: i32, %arg1: i32) -> (i32, i32, i32, i32) {
    %c0_i32 = arith.constant 0 : i32
    %c0_i32_0 = arith.constant 0 : i32
    %c0_i32_1 = arith.constant 0 : i32
    return %arg0, %arg1, %c0_i32, %c0_i32_0 : i32, i32, i32, i32
  }
  func.func @transform_2(%arg0: i32, %arg1: i32) -> (i32, i32, i32, i32) {
    %c0_i32 = arith.constant 0 : i32
    %c0_i32_0 = arith.constant 0 : i32
    %c0_i32_1 = arith.constant 0 : i32
    %c0_i32_2 = arith.constant 0 : i32
    %c0_i32_3 = arith.constant 0 : i32
    return %c0_i32, %c0_i32_0, %c0_i32_1, %c0_i32_2 : i32, i32, i32, i32
  }
}

</mosaic_0001>

<llo_original>
// kernel: tpu_custom_call.1
$region0: #{tpu_custom_call.1}
  #allocation0 [shape = 'u32[]', space=smem, size = 0x4, offset = 0x4, fixed_abs, tag = 'smem constant byte address 0x4 - core index']
  #allocation1 [shape = 'u32[144,128]{1,0:T(1,128)}', space=vmem, size = 0x12000, scoped, tag = 'internal scratch']
  %s0 = inlined_call_operand.hbm [shape: f32[2,4,1,8,128], index: 0, kind: input, shape index: {}]
  %s1 = inlined_call_operand.hbm [shape: s32[2,1,8,128], index: 1, kind: input, shape index: {}]
  %s2 = inlined_call_operand.hbm [shape: f32[3,4,8,128], index: 2, kind: output, shape index: {}]
  %s3 = sld [smem:[#allocation0]]
  $region53: #{tpu_custom_call.1} parent=0
    _
  %s5 = ssub.s32 1, %s3
  %s6 = scalar_select 0, %s5, %s3
  $region1: #{tpu_custom_call.1} parent=0
    #allocation2 [shape = 'u8[32768]{0}', space=vmem, size = 0x8000, scoped, tag = 'input window, operand 0']
    #allocation3 [shape = 's32[2]{0}', space=sflag, size = 0x8, scoped, tag = 'scoped memory for tpu_custom_call.1']
    #allocation4 [shape = 's32[2]{0}', space=sflag, size = 0x8, scoped, tag = 'scoped memory for tpu_custom_call.1']
    #allocation5 [shape = 'u8[8192]{0}', space=vmem, size = 0x2000, scoped, tag = 'input window, operand 1']
    #allocation6 [shape = 's32[2]{0}', space=sflag, size = 0x8, scoped, tag = 'scoped memory for tpu_custom_call.1']
    #allocation7 [shape = 'u8[49152]{0}', space=vmem, size = 0xc000, scoped, tag = 'output window, operand 0, single buffered']
    %7 = vsyncpa [#allocation3], 0
    %s8 = scalar_lea.sflag [#allocation3], 1
    %9 = vsyncpa %s8, 0
    %10 = vsyncpa [#allocation6], 0
    %s11 = scalar_lea.sflag [#allocation6], 1
    %12 = vsyncpa %s11, 0
    %13 = vsyncpa [#allocation4], 0
    loop: start=0, step=1, limit=4
    $region2: #{tpu_custom_call.1} parent=1 // loop_pre_header
      _
    $region3: #{tpu_custom_call.1} parent=1 // loop_header
      %s15 = sphi 0, %s19
      %p16 = scmp.ge.s32.totalorder %s15, 4
      %s22 = sphi 0, %s34
      %s23 = sphi 0, %s30
      %s24 = sphi 0, %s22
      %s25 = sphi 0, %s23
      %s26 = sphi 0, %s24
      %s27 = sphi 0, %s25
      %s39 = sphi 0, %s41
      %s42 = sphi 0, %s39
      %s43 = sphi 0, %s42
      %s59 = sphi 0, %s43
      %s67 = sphi 0, %s69
      %s70 = sphi 0, %s67
      %s71 = sphi 0, %s70
      %s87 = sphi 0, %s71
      %s91 = sphi 0, %s91
      %s93 = sphi 0, %s91
      %s94 = sphi 0, %s93
      %s108 = sphi 0, %s94
    $region4: #{tpu_custom_call.1} parent=1 // loop_header_branch
      %18 = sbr.rel (%p16) target = $region8
    $region5: #{tpu_custom_call.1} parent=1 // loop_body
      %s20 = ssub.s32 %s15, 1
      %s21 = ssub.s32 %s15, 2
      %s28 = sadd.s32 1, %s23
      %p29 = scmp.ge.s32.totalorder %s28, 1
      %s30 = scalar_select %p29, 0, %s28
      %s31 = sadd.s32 1, %s22
      %s32 = scalar_select %p29, %s31, %s22
      %p33 = scmp.ge.s32.totalorder %s32, 2
      %s34 = scalar_select %p33, 0, %s32
      %s35 = ssub.s32 %s22, %s34
      %s36 = ssub.s32 %s23, %s30
      %s37 = sor.u32 %s35, %s36
      %p38 = scmp.eq.s32.totalorder %s37, 0
      %s40 = sadd.s32 %s39, 1
      %s41 = scalar_select %p38, %s39, %s40
      %p44 = pneg %p38
      %p45 = scmp.eq.s32.totalorder %s15, 1
      %p46 = por %p44, %p45
      %p47 = scmp.ne.s32.totalorder %s39, %s42
      %p48 = scmp.eq.s32.totalorder %s15, 0
      %p49 = por %p47, %p48
      %p50 = scmp.ne.s32.totalorder %s39, %s42
      %p51 = scmp.eq.s32.totalorder %s20, 1
      %p52 = por %p50, %p51
      %p53 = scmp.ne.s32.totalorder %s42, %s43
      %p54 = scmp.eq.s32.totalorder %s20, 0
      %p55 = por %p53, %p54
      %p56 = scmp.ne.s32.totalorder %s42, %s43
      %p57 = scmp.eq.s32.totalorder %s21, 1
      %p58 = por %p56, %p57
      %p60 = scmp.ne.s32.totalorder %s43, %s59
      %p61 = scmp.eq.s32.totalorder %s21, 0
      %p62 = por %p60, %p61
      %s63 = ssub.s32 %s22, %s34
      %s64 = ssub.s32 %s23, %s30
      %s65 = sor.u32 %s63, %s64
      %p66 = scmp.eq.s32.totalorder %s65, 0
      %s68 = sadd.s32 %s67, 1
      %s69 = scalar_select %p66, %s67, %s68
      %p72 = pneg %p66
      %p73 = scmp.eq.s32.totalorder %s15, 1
      %p74 = por %p72, %p73
      %p75 = scmp.ne.s32.totalorder %s67, %s70
      %p76 = scmp.eq.s32.totalorder %s15, 0
      %p77 = por %p75, %p76
      %p78 = scmp.ne.s32.totalorder %s67, %s70
      %p79 = scmp.eq.s32.totalorder %s20, 1
      %p80 = por %p78, %p79
      %p81 = scmp.ne.s32.totalorder %s70, %s71
      %p82 = scmp.eq.s32.totalorder %s20, 0
      %p83 = por %p81, %p82
      %p84 = scmp.ne.s32.totalorder %s70, %s71
      %p85 = scmp.eq.s32.totalorder %s21, 1
      %p86 = por %p84, %p85
      %p88 = scmp.ne.s32.totalorder %s71, %s87
      %p89 = scmp.eq.s32.totalorder %s21, 0
      %p90 = por %p88, %p89
      %s92 = sadd.s32 %s91, 1
      %p95 = scmp.eq.s32.totalorder %s15, 1
      %p96 = scmp.ne.s32.totalorder %s91, %s93
      %p97 = scmp.eq.s32.totalorder %s15, 0
      %p98 = por %p96, %p97
      %p99 = scmp.ne.s32.totalorder %s91, %s93
      %p100 = scmp.eq.s32.totalorder %s20, 1
      %p101 = por %p99, %p100
      %p102 = scmp.ne.s32.totalorder %s93, %s94
      %p103 = scmp.eq.s32.totalorder %s20, 0
      %p104 = por %p102, %p103
      %p105 = scmp.ne.s32.totalorder %s93, %s94
      %p106 = scmp.eq.s32.totalorder %s21, 1
      %p107 = por %p105, %p106
      %p109 = scmp.ne.s32.totalorder %s94, %s108
      %p110 = scmp.eq.s32.totalorder %s21, 0
      %p111 = por %p109, %p110
      %p112 = scmp.le.s32.totalorder 1, %s15
      %p113 = scmp.lt.s32.totalorder %s15, 3
      %p114 = pnand %p112, %p113
      %p115 = pneg %p114
      // Predicated region
      $region9: #{tpu_custom_call.1} parent=5 // pred_check
        _
      $region10: #{tpu_custom_call.1} parent=5 // pred_check_branch
        %117 = sbr.rel (%p114) target = $region12
      $region11: #{tpu_custom_call.1} parent=5 // pred_region
        %s118 = ssub.s32 %s15, 1
      $region12: #{tpu_custom_call.1} parent=5 // pred_fallthru
        _
      %p119 = scmp.lt.s32.totalorder %s15, 2
      // Predicated region
      $region13: #{tpu_custom_call.1} parent=5 // pred_check
        %p120 = pneg %p119
      $region14: #{tpu_custom_call.1} parent=5 // pred_check_branch
        %122 = sbr.rel (%p120) target = $region16
      $region15: #{tpu_custom_call.1} parent=5 // pred_region
        // Predicated region
        $region17: #{tpu_custom_call.1} parent=15 // pred_check
          %p123 = pneg %p49
        $region18: #{tpu_custom_call.1} parent=15 // pred_check_branch
          %125 = sbr.rel (%p123) target = $region20
        $region19: #{tpu_custom_call.1} parent=15 // pred_region
          %s126 = sand.u32 %s39, 1
          %s127 = scalar_lea.sflag [#allocation3], %s126
          %s128 = sand.u32 %s39, 1
          %s129 = smul.addr %s128, 32
          %s130 = scalar_lea.vmem [#allocation2], %s129
          %s132 = ssub.s32 512, 512
          %133 = vsyncadd %s127, %s132
          %s134 = smul.addr %s22, 4
          %s135 = sadd.s32 %s23, %s134
          %s136 = smul.addr %s135, 128
          %s137 = scalar_lea.hbm %s0, %s136
          %s138 = sshll.u32 %s130, 4
          %s139 = int_to_ptr.vmem [resolvable:$true] %s138
          %144 = dma.hbm_to_vmem [thread:$0]  %s137, 512, %s139, %s127, 128, 128, 8
        $region20: #{tpu_custom_call.1} parent=15 // pred_fallthru
          _
        // Predicated region
        $region21: #{tpu_custom_call.1} parent=15 // pred_check
          %p145 = pneg %p77
        $region22: #{tpu_custom_call.1} parent=15 // pred_check_branch
          %147 = sbr.rel (%p145) target = $region24
        $region23: #{tpu_custom_call.1} parent=15 // pred_region
          %s148 = sand.u32 %s67, 1
          %s149 = scalar_lea.sflag [#allocation6], %s148
          %s150 = sand.u32 %s67, 1
          %s151 = smul.addr %s150, 8
          %s152 = scalar_lea.vmem [#allocation5], %s151
          %s154 = ssub.s32 128, 128
          %155 = vsyncadd %s149, %s154
          %s156 = sadd.s32 %s23, %s22
          %s157 = smul.addr %s156, 128
          %s158 = scalar_lea.hbm %s1, %s157
          %s160 = sshll.u32 %s152, 4
          %s161 = int_to_ptr.vmem [resolvable:$true] %s160
          %163 = dma.hbm_to_vmem [thread:$0]  %s158, 128, %s161, %s149
        $region24: #{tpu_custom_call.1} parent=15 // pred_fallthru
          _
      $region16: #{tpu_custom_call.1} parent=5 // pred_fallthru
        _
      %p164 = scmp.le.s32.totalorder 1, %s15
      %p165 = scmp.lt.s32.totalorder %s15, 3
      %p166 = pnand %p164, %p165
      %p167 = pneg %p166
      // Predicated region
      $region25: #{tpu_custom_call.1} parent=5 // pred_check
        _
      $region26: #{tpu_custom_call.1} parent=5 // pred_check_branch
        %169 = sbr.rel (%p166) target = $region28
      $region27: #{tpu_custom_call.1} parent=5 // pred_region
        %s170 = ssub.s32 %s15, 1
        %s171 = sand.u32 %s42, 1
        %s172 = scalar_lea.sflag [#allocation3], %s171
        %s173 = sand.u32 %s42, 1
        %s174 = smul.addr %s173, 32
        %s175 = scalar_lea.vmem [#allocation2], %s174
        // Predicated region
        $region29: #{tpu_custom_call.1} parent=27 // pred_check
          %p176 = pneg %p55
        $region30: #{tpu_custom_call.1} parent=27 // pred_check_branch
          %178 = sbr.rel (%p176) target = $region32
        $region31: #{tpu_custom_call.1} parent=27 // pred_region
          %179 = dma.done %s172, 512
        $region32: #{tpu_custom_call.1} parent=27 // pred_fallthru
          _
        %s180 = sand.u32 %s70, 1
        %s181 = scalar_lea.sflag [#allocation6], %s180
        %s182 = sand.u32 %s70, 1
        %s183 = smul.addr %s182, 8
        %s184 = scalar_lea.vmem [#allocation5], %s183
        // Predicated region
        $region33: #{tpu_custom_call.1} parent=27 // pred_check
          %p185 = pneg %p83
        $region34: #{tpu_custom_call.1} parent=27 // pred_check_branch
          %187 = sbr.rel (%p185) target = $region36
        $region35: #{tpu_custom_call.1} parent=27 // pred_region
          %188 = dma.done %s181, 128
        $region36: #{tpu_custom_call.1} parent=27 // pred_fallthru
          _
        %s189 = sand.u32 %s42, 1
        %s190 = scalar_lea.sflag [#allocation3], %s189
        %s191 = sand.u32 %s42, 1
        %s192 = smul.addr %s191, 32
        %s193 = scalar_lea.vmem [#allocation2], %s192
        %p194 = pneg %p55
        %p195 = pneg %p52
        %s196 = sand.u32 %s70, 1
        %s197 = scalar_lea.sflag [#allocation6], %s196
        %s198 = sand.u32 %s70, 1
        %s199 = smul.addr %s198, 8
        %s200 = scalar_lea.vmem [#allocation5], %s199
        %p201 = pneg %p83
        %p202 = pneg %p80
        %p203 = pneg %p104
        %p204 = pneg %p101
        %p205 = scmp.eq.s32.totalorder %s24, 0
        %p206 = scmp.eq.s32.totalorder %s25, 0
        %p207 = pnand %p205, %p206
        %p208 = pneg %p207
        // Predicated region
        $region37: #{tpu_custom_call.1} parent=27 // pred_check
          _
        $region38: #{tpu_custom_call.1} parent=27 // pred_check_branch
          %210 = sbr.rel (%p207) target = $region40
        $region39: #{tpu_custom_call.1} parent=27 // pred_region
          %211 = vst [vmem:[#allocation7] sm:$0xff] 0.0
          %212 = vst [vmem:[#allocation7 + $0x8] sm:$0xff] 0.0
          %213 = vst [vmem:[#allocation7 + $0x10] sm:$0xff] 0.0
          %214 = vst [vmem:[#allocation7 + $0x18] sm:$0xff] 0.0
          %215 = vst [vmem:[#allocation7 + $0x20] sm:$0xff] 0.0
          %216 = vst [vmem:[#allocation7 + $0x28] sm:$0xff] 0.0
          %217 = vst [vmem:[#allocation7 + $0x30] sm:$0xff] 0.0
          %218 = vst [vmem:[#allocation7 + $0x38] sm:$0xff] 0.0
          %219 = vst [vmem:[#allocation7 + $0x40] sm:$0xff] 0.0
          %220 = vst [vmem:[#allocation7 + $0x48] sm:$0xff] 0.0
          %221 = vst [vmem:[#allocation7 + $0x50] sm:$0xff] 0.0
          %222 = vst [vmem:[#allocation7 + $0x58] sm:$0xff] 0.0
        $region40: #{tpu_custom_call.1} parent=27 // pred_fallthru
          _
        %v223 = vld [vmem:[%s175] sm:$0xff]
        %v224 = vld [vmem:[%s175 + $0x8] sm:$0xff]
        %v225 = vld [vmem:[%s175 + $0x10] sm:$0xff]
        %v226 = vld [vmem:[%s175 + $0x18] sm:$0xff]
        %v227 = vld [vmem:[%s184] sm:$0xff]
        %v228 = vmax.f32 %v223, %v224
        %v229 = vmax.f32 %v225, %v226
        %v230 = vmax.f32 %v228, %v229
        %v231 = vsub.f32 %v223, %v230
        %v232 = vsub.f32 %v224, %v230
        %v233 = vsub.f32 %v225, %v230
        %v234 = vsub.f32 %v226, %v230
        %v235 = vmul.f32 %v231, 1.442695
        %v236 = vpow.pop %v235
        %v237 = vmul.f32 %v232, 1.442695
        %v238 = vpow.pop %v237
        %v239 = vmul.f32 %v233, 1.442695
        %v240 = vpow.pop %v239
        %v241 = vmul.f32 %v234, 1.442695
        %v242 = vpow.pop %v241
        %v243 = vadd.f32 %v236, %v238
        %v244 = vadd.f32 %v243, %v240
        %v245 = vadd.f32 %v244, %v242
        %v246 = vrcp.pop %v245
        %v247 = vmul.f32 1.0, %v246
        %v248 = vmul.f32 %v236, %v247
        %v249 = vmul.f32 %v238, %v247
        %v250 = vmul.f32 %v240, %v247
        %v251 = vmul.f32 %v242, %v247
        %vm252 = vcmp.eq.s32.totalorder %v227, 0
        %vm253 = vcmp.eq.s32.totalorder %v227, 1
        %vm254 = vcmp.eq.s32.totalorder %v227, 2
        %vm255 = vcmp.eq.s32.totalorder %v227, 3
        %v256 = vsel %vm252, 1, 0
        %v257 = vsel %vm253, 1, 0
        %v258 = vsel %vm254, 1, 0
        %v259 = vsel %vm255, 1, 0
        %v260 = vcvt.s32.f32 %v256
        %v261 = vcvt.s32.f32 %v257
        %v262 = vcvt.s32.f32 %v258
        %v263 = vcvt.s32.f32 %v259
        %vm264 = vcmp.ge.s32.totalorder %v227, 0
        %v265 = vsel %vm264, 1, 0
        %v266 = vcvt.s32.f32 %v265
        %v267 = vmul.f32 %v248, %v266
        %v268 = vmul.f32 %v249, %v266
        %v269 = vmul.f32 %v250, %v266
        %v270 = vmul.f32 %v251, %v266
        %v271 = vld [vmem:[#allocation7] sm:$0xff]
        %v272 = vld [vmem:[#allocation7 + $0x8] sm:$0xff]
        %v273 = vld [vmem:[#allocation7 + $0x10] sm:$0xff]
        %v274 = vld [vmem:[#allocation7 + $0x18] sm:$0xff]
        %v275 = vmul.f32 %v267, %v260
        %v276 = vmul.f32 %v268, %v261
        %v277 = vmul.f32 %v269, %v262
        %v278 = vmul.f32 %v270, %v263
        %v279 = vadd.f32 %v275, 0.0
        %v280 = vadd.f32 %v276, 0.0
        %v281 = vadd.f32 %v277, 0.0
        %v282 = vadd.f32 %v278, 0.0
        %v283 = vadd.f32 %v271, %v279
        %v284 = vadd.f32 %v272, %v280
        %v285 = vadd.f32 %v273, %v281
        %v286 = vadd.f32 %v274, %v282
        %287 = vst [vmem:[#allocation7] sm:$0xff] %v283
        %288 = vst [vmem:[#allocation7 + $0x8] sm:$0xff] %v284
        %289 = vst [vmem:[#allocation7 + $0x10] sm:$0xff] %v285
        %290 = vst [vmem:[#allocation7 + $0x18] sm:$0xff] %v286
        %s291 = scalar_lea.vmem [#allocation7], 32
        %v292 = vld [vmem:[%s291] sm:$0xff]
        %v293 = vld [vmem:[%s291 + $0x8] sm:$0xff]
        %v294 = vld [vmem:[%s291 + $0x10] sm:$0xff]
        %v295 = vld [vmem:[%s291 + $0x18] sm:$0xff]
        %v296 = vadd.f32 %v267, 0.0
        %v297 = vadd.f32 %v268, 0.0
        %v298 = vadd.f32 %v269, 0.0
        %v299 = vadd.f32 %v270, 0.0
        %v300 = vadd.f32 %v292, %v296
        %v301 = vadd.f32 %v293, %v297
        %v302 = vadd.f32 %v294, %v298
        %v303 = vadd.f32 %v295, %v299
        %304 = vst [vmem:[%s291] sm:$0xff] %v300
        %305 = vst [vmem:[%s291 + $0x8] sm:$0xff] %v301
        %306 = vst [vmem:[%s291 + $0x10] sm:$0xff] %v302
        %307 = vst [vmem:[%s291 + $0x18] sm:$0xff] %v303
        %s308 = scalar_lea.vmem [#allocation7], 64
        %v309 = vld [vmem:[%s308] sm:$0xff]
        %v310 = vld [vmem:[%s308 + $0x8] sm:$0xff]
        %v311 = vld [vmem:[%s308 + $0x10] sm:$0xff]
        %v312 = vld [vmem:[%s308 + $0x18] sm:$0xff]
        %v313 = vadd.f32 %v260, 0.0
        %v314 = vadd.f32 %v261, 0.0
        %v315 = vadd.f32 %v262, 0.0
        %v316 = vadd.f32 %v263, 0.0
        %v317 = vadd.f32 %v309, %v313
        %v318 = vadd.f32 %v310, %v314
        %v319 = vadd.f32 %v311, %v315
        %v320 = vadd.f32 %v312, %v316
        %321 = vst [vmem:[%s308] sm:$0xff] %v317
        %322 = vst [vmem:[%s308 + $0x8] sm:$0xff] %v318
        %323 = vst [vmem:[%s308 + $0x10] sm:$0xff] %v319
        %324 = vst [vmem:[%s308 + $0x18] sm:$0xff] %v320
        // Predicated region
        $region41: #{tpu_custom_call.1} parent=27 // pred_check
          %p325 = pneg %p101
        $region42: #{tpu_custom_call.1} parent=27 // pred_check_branch
          %327 = sbr.rel (%p325) target = $region44
        $region43: #{tpu_custom_call.1} parent=27 // pred_region
          %s329 = ssub.s32 1536, 1536
          %330 = vsyncadd [#allocation4], %s329
          %s331 = sshll.u32 [#allocation7], 4
          %s332 = int_to_ptr.vmem [resolvable:$true] %s331
          %337 = dma.vmem_to_hbm [thread:$0]  %s332, 1536, %s2, [#allocation4], 128, 128, 8
        $region44: #{tpu_custom_call.1} parent=27 // pred_fallthru
          _
        // Predicated region
        $region45: #{tpu_custom_call.1} parent=27 // pred_check
          %p338 = pneg %p101
        $region46: #{tpu_custom_call.1} parent=27 // pred_check_branch
          %340 = sbr.rel (%p338) target = $region48
        $region47: #{tpu_custom_call.1} parent=27 // pred_region
          %341 = dma.done [#allocation4], 1536
        $region48: #{tpu_custom_call.1} parent=27 // pred_fallthru
          _
      $region28: #{tpu_custom_call.1} parent=5 // pred_fallthru
        _
      %p342 = scmp.le.s32.totalorder 2, %s15
      // Predicated region
      $region49: #{tpu_custom_call.1} parent=5 // pred_check
        %p343 = pneg %p342
      $region50: #{tpu_custom_call.1} parent=5 // pred_check_branch
        %345 = sbr.rel (%p343) target = $region52
      $region51: #{tpu_custom_call.1} parent=5 // pred_region
        %s346 = ssub.s32 %s15, 2
      $region52: #{tpu_custom_call.1} parent=5 // pred_fallthru
        _
    $region6: #{tpu_custom_call.1} parent=1 // loop_footer
      %s19 = sadd.s32 1, %s15
    $region7: #{tpu_custom_call.1} parent=1 // loop_footer_branch
      %14 = sbr.rel target = $region3
    $region8: #{tpu_custom_call.1} parent=1 // loop_exit
      _
    %347 = vsyncpa [#allocation3], 1
    %s348 = scalar_lea.sflag [#allocation3], 1
    %349 = vsyncpa %s348, 1
    %350 = vsyncpa [#allocation6], 1
    %s351 = scalar_lea.sflag [#allocation6], 1
    %352 = vsyncpa %s351, 1
    %353 = vsyncpa [#allocation4], 1
    %s354 = scalar_lea.sflag [#allocation4], 1
    %355 = vsyncpa %s354, 1

</llo_original>
